<compile_context>
chip_gen: v5e
topology: v5e:2x2
jax: 0.10.0
libtpu: 0.0.40
codegen_flags: <defaults>
</compile_context>

<pallas_src>
import jax
import jax.numpy as jnp
from jax.experimental import pallas as pl
from jax.experimental.pallas import tpu as pltpu


def _sft_kernel(feat_ref, cond_ref, w1_ref, b1_ref, w2_ref, b2_ref, out_ref):
    C = out_ref.shape[1]

    feat = feat_ref[0]                         # (C, TP) f32 -- epilogue only
    cond = cond_ref[0].astype(w1_ref.dtype)    # (C, TP) -> matmul dtype (bf16)

    # Fused conv0 of both branches: (2C, C) @ (C, TP) -> (2C, TP) == [s ; h]
    a1 = jnp.dot(w1_ref[...], cond, preferred_element_type=jnp.float32)
    a1 = a1 + b1_ref[...]                      # (2C, 1) bias, lane-broadcast
    a1 = jnp.where(a1 >= 0, a1, 0.1 * a1)      # leaky_relu(0.1) in f32

    # Fused conv1 (block-diagonal): (2C, 2C) @ (2C, TP) -> (2C, TP) == [scale ; shift]
    a2 = jnp.dot(w2_ref[...], a1.astype(w2_ref.dtype),
                 preferred_element_type=jnp.float32)
    a2 = a2 + b2_ref[...]

    scale = a2[:C, :]
    shift = a2[C:, :]
    out_ref[0] = (feat * (scale + 1.0) + shift).astype(out_ref.dtype)


def _pack_params(params, nfeat, matmul_dtype):
    """Fuse 4 Conv2d(1x1) weights/biases into 2 weight blocks + 2 bias blocks."""
    def w2d(w):                                # (Cout, Cin, 1, 1) -> (Cout, Cin)
        return w[:, :, 0, 0]

    w1 = jnp.concatenate([w2d(params["w_s0"]), w2d(params["w_h0"])], axis=0)  # (2C, C)
    b1 = jnp.concatenate([params["b_s0"], params["b_h0"]], axis=0)            # (2C,)
    zeros = jnp.zeros((nfeat, nfeat), jnp.float32)
    w2 = jnp.block([[w2d(params["w_s1"]), zeros],
                    [zeros, w2d(params["w_h1"])]])                            # (2C, 2C)
    b2 = jnp.concatenate([params["b_s1"], params["b_h1"]], axis=0)            # (2C,)
    return (w1.astype(matmul_dtype),
            b1.reshape(2 * nfeat, 1).astype(jnp.float32),
            w2.astype(matmul_dtype),
            b2.reshape(2 * nfeat, 1).astype(jnp.float32))


def sft_layer(feat, cond, params, *, tp=2048, matmul_dtype=jnp.bfloat16):
    """feat, cond: (N, C, H, W) float32. params: 4 (C,C,1,1) weights + 4 (C,) biases."""
    N, C, H, W = feat.shape
    HW = H * W

    # Pixel tile: use `tp` (a multiple of 128) when it divides H*W, otherwise a
    # single full-extent block.  Either way the last BlockSpec dim is lane-dense.
    tile = tp if (tp % 128 == 0 and HW % tp == 0) else HW
    n_tiles = HW // tile

    feat3 = feat.reshape(N, C, HW)     # contiguous reshape: no HBM transpose
    cond3 = cond.reshape(N, C, HW)
    w1, b1, w2, b2 = _pack_params(params, C, matmul_dtype)

    px_spec = pl.BlockSpec((1, C, tile), lambda n, p: (n, 0, p))
    w1_spec = pl.BlockSpec((2 * C, C), lambda n, p: (0, 0))
    w2_spec = pl.BlockSpec((2 * C, 2 * C), lambda n, p: (0, 0))
    b_spec = pl.BlockSpec((2 * C, 1), lambda n, p: (0, 0))

    out3 = pl.pallas_call(
        _sft_kernel,
        out_shape=jax.ShapeDtypeStruct((N, C, HW), jnp.float32),
        grid_spec=pltpu.PrefetchScalarGridSpec(
            num_scalar_prefetch=0,
            grid=(N, n_tiles),
            in_specs=[px_spec, px_spec, w1_spec, b_spec, w2_spec, b_spec],
            out_specs=px_spec,
        ),
        compiler_params=pltpu.CompilerParams(
            dimension_semantics=("parallel", "parallel")),
    )(feat3, cond3, w1, b1, w2, b2)

    return out3.reshape(N, C, H, W)


def _reference(feat, cond, params):
    """Plain-JAX f32 reference of the PyTorch forward, NCHW."""
    def conv1x1(x, w, b):
        return jnp.einsum("nihw,oi->nohw", x, w[:, :, 0, 0]) + b[None, :, None, None]

    def lrelu(x):
        return jnp.where(x >= 0, x, 0.1 * x)

    scale = conv1x1(lrelu(conv1x1(cond, params["w_s0"], params["b_s0"])),
                    params["w_s1"], params["b_s1"])
    shift = conv1x1(lrelu(conv1x1(cond, params["w_h0"], params["b_h0"])),
                    params["w_h1"], params["b_h1"])
    return feat * (scale + 1.0) + shift


def _init_params(key, nfeat):
    keys = jax.random.split(key, 8)
    bound = 1.0 / jnp.sqrt(nfeat)

    def w(k):
        return jax.random.uniform(k, (nfeat, nfeat, 1, 1), jnp.float32, -bound, bound)

    def b(k):
        return jax.random.uniform(k, (nfeat,), jnp.float32, -bound, bound)

    return {
        "w_s0": w(keys[0]), "b_s0": b(keys[1]),
        "w_s1": w(keys[2]), "b_s1": b(keys[3]),
        "w_h0": w(keys[4]), "b_h0": b(keys[5]),
        "w_h1": w(keys[6]), "b_h1": b(keys[7]),
    }


if __name__ == "__main__":
    key = jax.random.PRNGKey(0)
    k_feat, k_cond, k_params = jax.random.split(key, 3)

    N, C, H, W = 2, 4, 16, 16
    feat = jax.random.normal(k_feat, (N, C, H, W), jnp.float32)   # x[0]
    cond = jax.random.normal(k_cond, (N, C, H, W), jnp.float32)   # x[1]
    params = _init_params(k_params, C)

    ref = _reference(feat, cond, params)

    # Strict structural check with f32 matmuls.
    out_f32 = jax.block_until_ready(
        sft_layer(feat, cond, params, matmul_dtype=jnp.float32))
    assert out_f32.shape == (N, C, H, W)
    assert jnp.allclose(out_f32, ref, atol=1e-5, rtol=1e-5), "f32 path mismatch"

    # Default path: bf16 matmul operands, f32 accumulation + epilogue.
    out = jax.block_until_ready(sft_layer(feat, cond, params))
    assert out.shape == (N, C, H, W)
    assert jnp.allclose(out, ref, atol=1e-1, rtol=1e-1), "bf16 path mismatch"

    print("KERNEL_OK")
</pallas_src>

<mosaic_0001>
module attributes {stable_mosaic.version = 11 : i64} {
  func.func @_sft_kernel(%arg0: i32, %arg1: i32, %arg2: memref<1x4x256xf32, #tpu.memory_space<vmem>>, %arg3: memref<1x4x256xf32, #tpu.memory_space<vmem>>, %arg4: memref<8x4xf32, #tpu.memory_space<vmem>>, %arg5: memref<8x1xf32, #tpu.memory_space<vmem>>, %arg6: memref<8x8xf32, #tpu.memory_space<vmem>>, %arg7: memref<8x1xf32, #tpu.memory_space<vmem>>, %arg8: memref<1x4x256xf32, #tpu.memory_space<vmem>>) attributes {dimension_semantics = [#tpu.dimension_semantics<parallel>, #tpu.dimension_semantics<parallel>], iteration_bounds = array<i64: 2, 1>, scalar_prefetch = 0 : i64, scratch_operands = 0 : i64, tpu.core_type = #tpu.core_type<tc>, window_params = [{transform_indices = @transform_0, window_bounds = array<i64: 1, 4, 256>}, {transform_indices = @transform_1, window_bounds = array<i64: 1, 4, 256>}, {pipeline_mode = #tpu.pipeline_mode<synchronous>, transform_indices = @transform_2, window_bounds = array<i64: 8, 4>}, {pipeline_mode = #tpu.pipeline_mode<synchronous>, transform_indices = @transform_3, window_bounds = array<i64: 8, 1>}, {pipeline_mode = #tpu.pipeline_mode<synchronous>, transform_indices = @transform_4, window_bounds = array<i64: 8, 8>}, {pipeline_mode = #tpu.pipeline_mode<synchronous>, transform_indices = @transform_5, window_bounds = array<i64: 8, 1>}, {transform_indices = @transform_6, window_bounds = array<i64: 1, 4, 256>}]} {
    %c0 = arith.constant 0 : index
    %c0_0 = arith.constant 0 : index
    %c0_1 = arith.constant 0 : index
    %0 = vector.load %arg2[%c0, %c0_0, %c0_1] : memref<1x4x256xf32, #tpu.memory_space<vmem>>, vector<1x4x256xf32>
    %1 = vector.shape_cast %0 : vector<1x4x256xf32> to vector<4x256xf32>
    %c0_2 = arith.constant 0 : index
    %c0_3 = arith.constant 0 : index
    %c0_4 = arith.constant 0 : index
    %2 = vector.load %arg3[%c0_2, %c0_3, %c0_4] : memref<1x4x256xf32, #tpu.memory_space<vmem>>, vector<1x4x256xf32>
    %3 = vector.shape_cast %2 : vector<1x4x256xf32> to vector<4x256xf32>
    %c0_5 = arith.constant 0 : index
    %c0_6 = arith.constant 0 : index
    %4 = vector.load %arg4[%c0_5, %c0_6] : memref<8x4xf32, #tpu.memory_space<vmem>>, vector<8x4xf32>
    %cst = arith.constant dense<0.000000e+00> : vector<8x256xf32>
    %5 = tpu.matmul %4, %3, %cst {dimension_numbers = #tpu.dot_dimension_numbers<[1], [0], [0], [1], [0, 0, 1, 1], [], []>} : vector<8x4xf32>, vector<4x256xf32>, vector<8x256xf32> -> vector<8x256xf32>
    %c0_7 = arith.constant 0 : index
    %c0_8 = arith.constant 0 : index
    %6 = vector.load %arg5[%c0_7, %c0_8] : memref<8x1xf32, #tpu.memory_space<vmem>>, vector<8x1xf32>
    %7 = vector.broadcast %6 : vector<8x1xf32> to vector<8x256xf32>
    %8 = arith.addf %5, %7 : vector<8x256xf32>
    %cst_9 = arith.constant 0.000000e+00 : f32
    %9 = vector.broadcast %cst_9 : f32 to vector<8x256xf32>
    %10 = arith.cmpf oge, %8, %9 : vector<8x256xf32>
    %cst_10 = arith.constant 1.000000e-01 : f32
    %11 = vector.broadcast %cst_10 : f32 to vector<8x256xf32>
    %12 = arith.mulf %11, %8 : vector<8x256xf32>
    %13 = arith.select %10, %8, %12 : vector<8x256xi1>, vector<8x256xf32>
    %c0_11 = arith.constant 0 : index
    %c0_12 = arith.constant 0 : index
    %14 = vector.load %arg6[%c0_11, %c0_12] : memref<8x8xf32, #tpu.memory_space<vmem>>, vector<8x8xf32>
    %cst_13 = arith.constant dense<0.000000e+00> : vector<8x256xf32>
    %15 = tpu.matmul %14, %13, %cst_13 {dimension_numbers = #tpu.dot_dimension_numbers<[1], [0], [0], [1], [0, 0, 1, 1], [], []>} : vector<8x8xf32>, vector<8x256xf32>, vector<8x256xf32> -> vector<8x256xf32>
    %c0_14 = arith.constant 0 : index
    %c0_15 = arith.constant 0 : index
    %16 = vector.load %arg7[%c0_14, %c0_15] : memref<8x1xf32, #tpu.memory_space<vmem>>, vector<8x1xf32>
    %17 = vector.broadcast %16 : vector<8x1xf32> to vector<8x256xf32>
    %18 = arith.addf %15, %17 : vector<8x256xf32>
    %19 = vector.extract_strided_slice %18 {offsets = [0, 0], sizes = [4, 256], strides = [1, 1]} : vector<8x256xf32> to vector<4x256xf32>
    %20 = vector.extract_strided_slice %18 {offsets = [4, 0], sizes = [4, 256], strides = [1, 1]} : vector<8x256xf32> to vector<4x256xf32>
    %cst_16 = arith.constant 1.000000e+00 : f32
    %21 = vector.broadcast %cst_16 : f32 to vector<4x256xf32>
    %22 = arith.addf %19, %21 : vector<4x256xf32>
    %23 = arith.mulf %1, %22 : vector<4x256xf32>
    %24 = arith.addf %23, %20 : vector<4x256xf32>
    %c0_17 = arith.constant 0 : index
    %c0_18 = arith.constant 0 : index
    %c0_19 = arith.constant 0 : index
    %25 = vector.load %arg8[%c0_17, %c0_18, %c0_19] : memref<1x4x256xf32, #tpu.memory_space<vmem>>, vector<1x4x256xf32>
    %26 = vector.shape_cast %25 : vector<1x4x256xf32> to vector<4x256xf32>
    %27 = vector.shape_cast %24 : vector<4x256xf32> to vector<1x4x256xf32>
    tpu.vector_store %arg8[%c0_17, %c0_18, %c0_19], %27 {strides = array<i32>} : memref<1x4x256xf32, #tpu.memory_space<vmem>>, vector<1x4x256xf32>,
    return
  }
  func.func @transform_0(%arg0: i32, %arg1: i32) -> (i32, i32, i32) {
    %c0_i32 = arith.constant 0 : i32
    %c0_i32_0 = arith.constant 0 : i32
    return %arg0, %c0_i32, %arg1 : i32, i32, i32
  }
  func.func @transform_1(%arg0: i32, %arg1: i32) -> (i32, i32, i32) {
    %c0_i32 = arith.constant 0 : i32
    %c0_i32_0 = arith.constant 0 : i32
    return %arg0, %c0_i32, %arg1 : i32, i32, i32
  }
  func.func @transform_2(%arg0: i32, %arg1: i32) -> (i32, i32) {
    %c0_i32 = arith.constant 0 : i32
    %c0_i32_0 = arith.constant 0 : i32
    %c0_i32_1 = arith.constant 0 : i32
    return %c0_i32, %c0_i32_0 : i32, i32
  }
  func.func @transform_3(%arg0: i32, %arg1: i32) -> (i32, i32) {
    %c0_i32 = arith.constant 0 : i32
    %c0_i32_0 = arith.constant 0 : i32
    %c0_i32_1 = arith.constant 0 : i32
    return %c0_i32, %c0_i32_0 : i32, i32
  }
  func.func @transform_4(%arg0: i32, %arg1: i32) -> (i32, i32) {
    %c0_i32 = arith.constant 0 : i32
    %c0_i32_0 = arith.constant 0 : i32
    %c0_i32_1 = arith.constant 0 : i32
    return %c0_i32, %c0_i32_0 : i32, i32
  }
  func.func @transform_5(%arg0: i32, %arg1: i32) -> (i32, i32) {
    %c0_i32 = arith.constant 0 : i32
    %c0_i32_0 = arith.constant 0 : i32
    %c0_i32_1 = arith.constant 0 : i32
    return %c0_i32, %c0_i32_0 : i32, i32
  }
  func.func @transform_6(%arg0: i32, %arg1: i32) -> (i32, i32, i32) {
    %c0_i32 = arith.constant 0 : i32
    %c0_i32_0 = arith.constant 0 : i32
    return %arg0, %c0_i32, %arg1 : i32, i32, i32
  }
}

</mosaic_0001>

<llo_original>
// kernel: tpu_custom_call.1
$region0: #{tpu_custom_call.1}
  #allocation0 [shape = 'u32[]', space=smem, size = 0x4, offset = 0x4, fixed_abs, tag = 'smem constant byte address 0x4 - core index']
  #allocation1 [shape = 'u32[72,128]{1,0:T(1,128)}', space=vmem, size = 0x9000, scoped, tag = 'internal scratch']
  %s0 = inlined_call_operand.vmem [shape: f32[2,4,256], index: 0, kind: input, shape index: {}]
  %s1 = inlined_call_operand.hbm [shape: f32[2,4,256], index: 1, kind: input, shape index: {}]
  %s2 = inlined_call_operand.vmem [shape: f32[8,4], index: 2, kind: input, shape index: {}]
  %s3 = inlined_call_operand.vmem [shape: f32[8,1], index: 3, kind: input, shape index: {}]
  %s4 = inlined_call_operand.vmem [shape: f32[8,8], index: 4, kind: input, shape index: {}]
  %s5 = inlined_call_operand.vmem [shape: f32[8,1], index: 5, kind: input, shape index: {}]
  %s6 = inlined_call_operand.hbm [shape: f32[2,4,256], index: 6, kind: output, shape index: {}]
  %s7 = sld [smem:[#allocation0]]
  $region61: #{tpu_custom_call.1} parent=0
    _
  %s9 = ssub.s32 1, %s7
  %s10 = scalar_select 0, %s9, %s7
  $region1: #{tpu_custom_call.1} parent=0
    #allocation2 [shape = 'u8[8192]{0}', space=vmem, size = 0x2000, scoped, tag = 'input window, operand 1']
    #allocation3 [shape = 's32[2]{0}', space=sflag, size = 0x8, scoped, tag = 'scoped memory for tpu_custom_call.1']
    #allocation4 [shape = 's32[2]{0}', space=sflag, size = 0x8, scoped, tag = 'scoped memory for tpu_custom_call.1']
    #allocation5 [shape = 'u8[8192]{0}', space=vmem, size = 0x2000, scoped, tag = 'output window, operand 0']
    %11 = vsyncpa [#allocation3], 0
    %s12 = scalar_lea.sflag [#allocation3], 1
    %13 = vsyncpa %s12, 0
    %14 = vsyncpa [#allocation4], 0
    %s15 = scalar_lea.sflag [#allocation4], 1
    %16 = vsyncpa %s15, 0
    loop: start=0, step=1, limit=4
    $region2: #{tpu_custom_call.1} parent=1 // loop_pre_header
      _
    $region3: #{tpu_custom_call.1} parent=1 // loop_header
      %s18 = sphi 0, %s22
      %p19 = scmp.ge.s32.totalorder %s18, 4
      %s25 = sphi 0, %s37
      %s26 = sphi 0, %s33
      %s27 = sphi 0, %s25
      %s28 = sphi 0, %s26
      %s29 = sphi 0, %s27
      %s30 = sphi 0, %s28
      %s42 = sphi 0, %s44
      %s45 = sphi 0, %s42
      %s46 = sphi 0, %s45
      %s62 = sphi 0, %s46
      %s70 = sphi 0, %s72
      %s73 = sphi 0, %s70
      %s74 = sphi 0, %s73
      %s90 = sphi 0, %s74
      %s94 = sphi 0, %s94
      %s96 = sphi 0, %s94
      %s97 = sphi 0, %s96
      %s111 = sphi 0, %s97
      %s115 = sphi 0, %s115
      %s117 = sphi 0, %s115
      %s118 = sphi 0, %s117
      %s132 = sphi 0, %s118
      %s136 = sphi 0, %s136
      %s138 = sphi 0, %s136
      %s139 = sphi 0, %s138
      %s153 = sphi 0, %s139
      %s157 = sphi 0, %s157
      %s159 = sphi 0, %s157
      %s160 = sphi 0, %s159
      %s174 = sphi 0, %s160
      %s182 = sphi 0, %s184
      %s185 = sphi 0, %s182
      %s186 = sphi 0, %s185
      %s202 = sphi 0, %s186
    $region4: #{tpu_custom_call.1} parent=1 // loop_header_branch
      %21 = sbr.rel (%p19) target = $region8
    $region5: #{tpu_custom_call.1} parent=1 // loop_body
      %s23 = ssub.s32 %s18, 1
      %s24 = ssub.s32 %s18, 2
      %s31 = sadd.s32 1, %s26
      %p32 = scmp.ge.s32.totalorder %s31, 1
      %s33 = scalar_select %p32, 0, %s31
      %s34 = sadd.s32 1, %s25
      %s35 = scalar_select %p32, %s34, %s25
      %p36 = scmp.ge.s32.totalorder %s35, 2
      %s37 = scalar_select %p36, 0, %s35
      %s38 = ssub.s32 %s25, %s37
      %s39 = ssub.s32 %s26, %s33
      %s40 = sor.u32 %s38, %s39
      %p41 = scmp.eq.s32.totalorder %s40, 0
      %s43 = sadd.s32 %s42, 1
      %s44 = scalar_select %p41, %s42, %s43
      %p47 = pneg %p41
      %p48 = scmp.eq.s32.totalorder %s18, 1
      %p49 = por %p47, %p48
      %p50 = scmp.ne.s32.totalorder %s42, %s45
      %p51 = scmp.eq.s32.totalorder %s18, 0
      %p52 = por %p50, %p51
      %p53 = scmp.ne.s32.totalorder %s42, %s45
      %p54 = scmp.eq.s32.totalorder %s23, 1
      %p55 = por %p53, %p54
      %p56 = scmp.ne.s32.totalorder %s45, %s46
      %p57 = scmp.eq.s32.totalorder %s23, 0
      %p58 = por %p56, %p57
      %p59 = scmp.ne.s32.totalorder %s45, %s46
      %p60 = scmp.eq.s32.totalorder %s24, 1
      %p61 = por %p59, %p60
      %p63 = scmp.ne.s32.totalorder %s46, %s62
      %p64 = scmp.eq.s32.totalorder %s24, 0
      %p65 = por %p63, %p64
      %s66 = ssub.s32 %s25, %s37
      %s67 = ssub.s32 %s26, %s33
      %s68 = sor.u32 %s66, %s67
      %p69 = scmp.eq.s32.totalorder %s68, 0
      %s71 = sadd.s32 %s70, 1
      %s72 = scalar_select %p69, %s70, %s71
      %p75 = pneg %p69
      %p76 = scmp.eq.s32.totalorder %s18, 1
      %p77 = por %p75, %p76
      %p78 = scmp.ne.s32.totalorder %s70, %s73
      %p79 = scmp.eq.s32.totalorder %s18, 0
      %p80 = por %p78, %p79
      %p81 = scmp.ne.s32.totalorder %s70, %s73
      %p82 = scmp.eq.s32.totalorder %s23, 1
      %p83 = por %p81, %p82
      %p84 = scmp.ne.s32.totalorder %s73, %s74
      %p85 = scmp.eq.s32.totalorder %s23, 0
      %p86 = por %p84, %p85
      %p87 = scmp.ne.s32.totalorder %s73, %s74
      %p88 = scmp.eq.s32.totalorder %s24, 1
      %p89 = por %p87, %p88
      %p91 = scmp.ne.s32.totalorder %s74, %s90
      %p92 = scmp.eq.s32.totalorder %s24, 0
      %p93 = por %p91, %p92
      %s95 = sadd.s32 %s94, 1
      %p98 = scmp.eq.s32.totalorder %s18, 1
      %p99 = scmp.ne.s32.totalorder %s94, %s96
      %p100 = scmp.eq.s32.totalorder %s18, 0
      %p101 = por %p99, %p100
      %p102 = scmp.ne.s32.totalorder %s94, %s96
      %p103 = scmp.eq.s32.totalorder %s23, 1
      %p104 = por %p102, %p103
      %p105 = scmp.ne.s32.totalorder %s96, %s97
      %p106 = scmp.eq.s32.totalorder %s23, 0
      %p107 = por %p105, %p106
      %p108 = scmp.ne.s32.totalorder %s96, %s97
      %p109 = scmp.eq.s32.totalorder %s24, 1
      %p110 = por %p108, %p109
      %p112 = scmp.ne.s32.totalorder %s97, %s111
      %p113 = scmp.eq.s32.totalorder %s24, 0
      %p114 = por %p112, %p113
      %s116 = sadd.s32 %s115, 1
      %p119 = scmp.eq.s32.totalorder %s18, 1
      %p120 = scmp.ne.s32.totalorder %s115, %s117
      %p121 = scmp.eq.s32.totalorder %s18, 0
      %p122 = por %p120, %p121
      %p123 = scmp.ne.s32.totalorder %s115, %s117
      %p124 = scmp.eq.s32.totalorder %s23, 1
      %p125 = por %p123, %p124
      %p126 = scmp.ne.s32.totalorder %s117, %s118
      %p127 = scmp.eq.s32.totalorder %s23, 0
      %p128 = por %p126, %p127
      %p129 = scmp.ne.s32.totalorder %s117, %s118
      %p130 = scmp.eq.s32.totalorder %s24, 1
      %p131 = por %p129, %p130
      %p133 = scmp.ne.s32.totalorder %s118, %s132
      %p134 = scmp.eq.s32.totalorder %s24, 0
      %p135 = por %p133, %p134
      %s137 = sadd.s32 %s136, 1
      %p140 = scmp.eq.s32.totalorder %s18, 1
      %p141 = scmp.ne.s32.totalorder %s136, %s138
      %p142 = scmp.eq.s32.totalorder %s18, 0
      %p143 = por %p141, %p142
      %p144 = scmp.ne.s32.totalorder %s136, %s138
      %p145 = scmp.eq.s32.totalorder %s23, 1
      %p146 = por %p144, %p145
      %p147 = scmp.ne.s32.totalorder %s138, %s139
      %p148 = scmp.eq.s32.totalorder %s23, 0
      %p149 = por %p147, %p148
      %p150 = scmp.ne.s32.totalorder %s138, %s139
      %p151 = scmp.eq.s32.totalorder %s24, 1
      %p152 = por %p150, %p151
      %p154 = scmp.ne.s32.totalorder %s139, %s153
      %p155 = scmp.eq.s32.totalorder %s24, 0
      %p156 = por %p154, %p155
      %s158 = sadd.s32 %s157, 1
      %p161 = scmp.eq.s32.totalorder %s18, 1
      %p162 = scmp.ne.s32.totalorder %s157, %s159
      %p163 = scmp.eq.s32.totalorder %s18, 0
      %p164 = por %p162, %p163
      %p165 = scmp.ne.s32.totalorder %s157, %s159
      %p166 = scmp.eq.s32.totalorder %s23, 1
      %p167 = por %p165, %p166
      %p168 = scmp.ne.s32.totalorder %s159, %s160
      %p169 = scmp.eq.s32.totalorder %s23, 0
      %p170 = por %p168, %p169
      %p171 = scmp.ne.s32.totalorder %s159, %s160
      %p172 = scmp.eq.s32.totalorder %s24, 1
      %p173 = por %p171, %p172
      %p175 = scmp.ne.s32.totalorder %s160, %s174
      %p176 = scmp.eq.s32.totalorder %s24, 0
      %p177 = por %p175, %p176
      %s178 = ssub.s32 %s25, %s37
      %s179 = ssub.s32 %s26, %s33
      %s180 = sor.u32 %s178, %s179
      %p181 = scmp.eq.s32.totalorder %s180, 0
      %s183 = sadd.s32 %s182, 1
      %s184 = scalar_select %p181, %s182, %s183
      %p187 = pneg %p181
      %p188 = scmp.eq.s32.totalorder %s18, 1
      %p189 = por %p187, %p188
      %p190 = scmp.ne.s32.totalorder %s182, %s185
      %p191 = scmp.eq.s32.totalorder %s18, 0
      %p192 = por %p190, %p191
      %p193 = scmp.ne.s32.totalorder %s182, %s185
      %p194 = scmp.eq.s32.totalorder %s23, 1
      %p195 = por %p193, %p194
      %p196 = scmp.ne.s32.totalorder %s185, %s186
      %p197 = scmp.eq.s32.totalorder %s23, 0
      %p198 = por %p196, %p197
      %p199 = scmp.ne.s32.totalorder %s185, %s186
      %p200 = scmp.eq.s32.totalorder %s24, 1
      %p201 = por %p199, %p200
      %p203 = scmp.ne.s32.totalorder %s186, %s202
      %p204 = scmp.eq.s32.totalorder %s24, 0
      %p205 = por %p203, %p204
      %p206 = scmp.le.s32.totalorder 1, %s18
      %p207 = scmp.lt.s32.totalorder %s18, 3
      %p208 = pnand %p206, %p207
      %p209 = pneg %p208
      // Predicated region
      $region9: #{tpu_custom_call.1} parent=5 // pred_check
        _
      $region10: #{tpu_custom_call.1} parent=5 // pred_check_branch
        %211 = sbr.rel (%p208) target = $region12
      $region11: #{tpu_custom_call.1} parent=5 // pred_region
        %s212 = ssub.s32 %s18, 1
        // Predicated region
        $region13: #{tpu_custom_call.1} parent=11 // pred_check
          %p213 = pneg %p107
        $region14: #{tpu_custom_call.1} parent=11 // pred_check_branch
          %215 = sbr.rel (%p213) target = $region16
        $region15: #{tpu_custom_call.1} parent=11 // pred_region
          _
        $region16: #{tpu_custom_call.1} parent=11 // pred_fallthru
          _
        // Predicated region
        $region17: #{tpu_custom_call.1} parent=11 // pred_check
          %p216 = pneg %p128
        $region18: #{tpu_custom_call.1} parent=11 // pred_check_branch
          %218 = sbr.rel (%p216) target = $region20
        $region19: #{tpu_custom_call.1} parent=11 // pred_region
          _
        $region20: #{tpu_custom_call.1} parent=11 // pred_fallthru
          _
        // Predicated region
        $region21: #{tpu_custom_call.1} parent=11 // pred_check
          %p219 = pneg %p149
        $region22: #{tpu_custom_call.1} parent=11 // pred_check_branch
          %221 = sbr.rel (%p219) target = $region24
        $region23: #{tpu_custom_call.1} parent=11 // pred_region
          _
        $region24: #{tpu_custom_call.1} parent=11 // pred_fallthru
          _
        // Predicated region
        $region25: #{tpu_custom_call.1} parent=11 // pred_check
          %p222 = pneg %p170
        $region26: #{tpu_custom_call.1} parent=11 // pred_check_branch
          %224 = sbr.rel (%p222) target = $region28
        $region27: #{tpu_custom_call.1} parent=11 // pred_region
          _
        $region28: #{tpu_custom_call.1} parent=11 // pred_fallthru
          _
      $region12: #{tpu_custom_call.1} parent=5 // pred_fallthru
        _
      %p225 = scmp.lt.s32.totalorder %s18, 2
      // Predicated region
      $region29: #{tpu_custom_call.1} parent=5 // pred_check
        %p226 = pneg %p225
      $region30: #{tpu_custom_call.1} parent=5 // pred_check_branch
        %228 = sbr.rel (%p226) target = $region32
      $region31: #{tpu_custom_call.1} parent=5 // pred_region
        // Predicated region
        $region33: #{tpu_custom_call.1} parent=31 // pred_check
          %p229 = pneg %p52
        $region34: #{tpu_custom_call.1} parent=31 // pred_check_branch
          %231 = sbr.rel (%p229) target = $region36
        $region35: #{tpu_custom_call.1} parent=31 // pred_region
          %s232 = smul.u32 2, %s26
          %p233 = scmp.lt.s32.totalorder %s25, 1
          %s234 = scalar_select %p233, %s25, 1
          %p235 = scmp.lt.s32.totalorder %s232, 1
          %s236 = scalar_select %p235, %s232, 1
          %s237 = smul.addr %s234, 2
          %s238 = sadd.s32 %s236, %s237
          %s239 = smul.addr %s238, 4
          %s240 = scalar_lea.vmem %s0, %s239
          %s241 = smul.u32 2, %s26
        $region36: #{tpu_custom_call.1} parent=31 // pred_fallthru
          _
        // Predicated region
        $region37: #{tpu_custom_call.1} parent=31 // pred_check
          %p242 = pneg %p80
        $region38: #{tpu_custom_call.1} parent=31 // pred_check_branch
          %244 = sbr.rel (%p242) target = $region40
        $region39: #{tpu_custom_call.1} parent=31 // pred_region
          %s245 = sand.u32 %s70, 1
          %s246 = scalar_lea.sflag [#allocation3], %s245
          %s247 = sand.u32 %s70, 1
          %s248 = smul.addr %s247, 8
          %s249 = scalar_lea.vmem [#allocation2], %s248
          %s250 = smul.u32 2, %s26
          %252 = vsyncadd %s246, 0
          %s253 = smul.addr %s25, 2
          %s254 = sadd.s32 %s250, %s253
          %s255 = smul.addr %s254, 4
          %s256 = scalar_lea.hbm %s1, %s255
          %s258 = sshll.u32 %s256, 4
          %s259 = int_to_ptr.hbm [resolvable:$true] %s258
          %s260 = sshll.u32 %s249, 4
          %s261 = int_to_ptr.vmem [resolvable:$true] %s260
          %263 = dma.hbm_to_vmem [thread:$0]  %s259, 128, %s261, %s246
        $region40: #{tpu_custom_call.1} parent=31 // pred_fallthru
          _
      $region32: #{tpu_custom_call.1} parent=5 // pred_fallthru
        _
      %p264 = scmp.le.s32.totalorder 1, %s18
      %p265 = scmp.lt.s32.totalorder %s18, 3
      %p266 = pnand %p264, %p265
      %p267 = pneg %p266
      // Predicated region
      $region41: #{tpu_custom_call.1} parent=5 // pred_check
        _
      $region42: #{tpu_custom_call.1} parent=5 // pred_check_branch
        %269 = sbr.rel (%p266) target = $region44
      $region43: #{tpu_custom_call.1} parent=5 // pred_region
        %s270 = ssub.s32 %s18, 1
        %s271 = sand.u32 %s73, 1
        %s272 = scalar_lea.sflag [#allocation3], %s271
        %s273 = sand.u32 %s73, 1
        %s274 = smul.addr %s273, 8
        %s275 = scalar_lea.vmem [#allocation2], %s274
        // Predicated region
        $region45: #{tpu_custom_call.1} parent=43 // pred_check
          %p276 = pneg %p86
        $region46: #{tpu_custom_call.1} parent=43 // pred_check_branch
          %278 = sbr.rel (%p276) target = $region48
        $region47: #{tpu_custom_call.1} parent=43 // pred_region
          %280 = dma.done %s272, 128
        $region48: #{tpu_custom_call.1} parent=43 // pred_fallthru
          _
        %s281 = smul.u32 2, %s28
        %p282 = scmp.lt.s32.totalorder %s27, 1
        %s283 = scalar_select %p282, %s27, 1
        %p284 = scmp.lt.s32.totalorder %s281, 1
        %s285 = scalar_select %p284, %s281, 1
        %s286 = smul.addr %s283, 2
        %s287 = sadd.s32 %s285, %s286
        %s288 = smul.addr %s287, 4
        %s289 = scalar_lea.vmem %s0, %s288
        %p290 = pneg %p58
        %p291 = pneg %p55
        %s292 = sand.u32 %s73, 1
        %s293 = scalar_lea.sflag [#allocation3], %s292
        %s294 = sand.u32 %s73, 1
        %s295 = smul.addr %s294, 8
        %s296 = scalar_lea.vmem [#allocation2], %s295
        %p297 = pneg %p86
        %p298 = pneg %p83
        %p299 = pneg %p107
        %p300 = pneg %p104
        %p301 = pneg %p128
        %p302 = pneg %p125
        %p303 = pneg %p149
        %p304 = pneg %p146
        %p305 = pneg %p170
        %p306 = pneg %p167
        %p307 = pneg %p198
        %p308 = pneg %p195
        %s309 = sand.u32 %s185, 1
        %s310 = scalar_lea.sflag [#allocation4], %s309
        %s311 = sand.u32 %s185, 1
        %s312 = smul.addr %s311, 8
        %s313 = scalar_lea.vmem [#allocation5], %s312
        %s314 = smul.u32 2, %s28
        %p315 = scmp.lt.s32.totalorder %s27, 1
        %s316 = scalar_select %p315, %s27, 1
        %p317 = scmp.lt.s32.totalorder %s314, 1
        %s318 = scalar_select %p317, %s314, 1
        %s319 = smul.addr %s316, 2
        %s320 = sadd.s32 %s318, %s319
        %s321 = smul.addr %s320, 4
        %s322 = scalar_lea.vmem %s0, %s321
        %s323 = smul.u32 2, %s28
        %s324 = smul.u32 2, %s28
        %s325 = smul.u32 2, %s28
        %v326 = vld [vmem:[%s322] sm:$0xff]
        %v327 = vld [vmem:[%s275] sm:$0xff]
        %v328 = vld [vmem:[%s2] sm:$0xff]
        %v329 = vld [vmem:[%s3] sm:$0xff]
        %331 = vset.pattern.permute.xlu0 0
        %332 = vperm.xlu0 %331, %v329
        %v333 = vpop.permute.xlu0 %332
        %336 = vst [vmem:[#allocation1] ss:$2 sm:$0xff] %v327
        %v337 = vld.sshfl [vmem:[#allocation1] sm:$0xff pattern:$0x75316420]
        %v338 = vld.sshfl [vmem:[#allocation1 + $0x8] sm:$0xff pattern:$0x75316420]
        %vm339 = vcmask 31744
        %v341 = vsel %vm339, %v328, 0
        %vm343 = vcmask 1043456
        %v344 = vsel %vm343, %v337, 0
        %v346 = vsel %vm343, %v338, 0
        %348 = vmatpush.msra.mxu0 0.0
        %349 = vmatpush.msra.mxu0 0.0
        %350 = vmatpush.msra.mxu0 0.0
        %351 = vmatpush.msra.mxu0 0.0
        %352 = vmatpush.msra.mxu0 0.0
        %353 = vmatpush.msra.mxu0 0.0
        %354 = vmatpush.msra.mxu0 0.0
        %355 = vmatpush.msra.mxu0 0.0
        %356 = vmatpush.msra.mxu0 0.0
        %357 = vmatpush.msra.mxu0 0.0
        %358 = vmatpush.msra.mxu0 0.0
        %359 = vmatpush.msra.mxu0 0.0
        %360 = vmatpush.msra.mxu0 0.0
        %361 = vmatpush.msra.mxu0 0.0
        %362 = vmatpush.msra.mxu0 0.0
        %363 = vmatpush.msra.mxu0 %v344
        %364 = vmatmul.f32.gmra.mxu0 %v341
        %v365 = vpop.f32.mrf.mxu0
        %v366 = vadd.f32 %v333, %v365
        %367 = vdwg.mxu0
        %368 = vmatpush.msra.mxu0 0.0
        %369 = vmatpush.msra.mxu0 0.0
        %370 = vmatpush.msra.mxu0 0.0
        %371 = vmatpush.msra.mxu0 0.0
        %372 = vmatpush.msra.mxu0 0.0
        %373 = vmatpush.msra.mxu0 0.0
        %374 = vmatpush.msra.mxu0 0.0
        %375 = vmatpush.msra.mxu0 0.0
        %376 = vmatpush.msra.mxu0 0.0
        %377 = vmatpush.msra.mxu0 0.0
        %378 = vmatpush.msra.mxu0 0.0
        %379 = vmatpush.msra.mxu0 0.0
        %380 = vmatpush.msra.mxu0 0.0
        %381 = vmatpush.msra.mxu0 0.0
        %382 = vmatpush.msra.mxu0 0.0
        %383 = vmatpush.msra.mxu0 %v346
        %384 = vmatmul.f32.gmra.mxu0 %v341
        %v385 = vpop.f32.mrf.mxu0
        %v386 = vadd.f32 %v333, %v385
        %387 = vdwg.mxu0
        %vm388 = vcmp.ge.f32.partialorder %v366, 0.0
        %vm389 = vcmp.ge.f32.partialorder %v386, 0.0
        %v390 = vmul.f32 %v366, 0.1
        %v391 = vmul.f32 %v386, 0.1
        %v392 = vsel %vm388, %v366, %v390
        %v393 = vsel %vm389, %v386, %v391
        %v394 = vld [vmem:[%s4] sm:$0xff]
        %v395 = vld [vmem:[%s5] sm:$0xff]
        %397 = vset.pattern.permute.xlu0 0
        %398 = vperm.xlu0 %397, %v395
        %v399 = vpop.permute.xlu0 %398
        %vm401 = vcmask 64512
        %v403 = vsel %vm401, %v394, 0
        %405 = vmatpush.msra.mxu0 0.0
        %406 = vmatpush.msra.mxu0 0.0
        %407 = vmatpush.msra.mxu0 0.0
        %408 = vmatpush.msra.mxu0 0.0
        %409 = vmatpush.msra.mxu0 0.0
        %410 = vmatpush.msra.mxu0 0.0
        %411 = vmatpush.msra.mxu0 0.0
        %412 = vmatpush.msra.mxu0 0.0
        %413 = vmatpush.msra.mxu0 0.0
        %414 = vmatpush.msra.mxu0 0.0
        %415 = vmatpush.msra.mxu0 0.0
        %416 = vmatpush.msra.mxu0 0.0
        %417 = vmatpush.msra.mxu0 0.0
        %418 = vmatpush.msra.mxu0 0.0
        %419 = vmatpush.msra.mxu0 0.0
        %420 = vmatpush.msra.mxu0 %v392
        %421 = vmatmul.f32.gmra.mxu0 %v403
        %v422 = vpop.f32.mrf.mxu0
        %v423 = vadd.f32 %v399, %v422
        %424 = vdwg.mxu0
        %425 = vmatpush.msra.mxu0 0.0
        %426 = vmatpush.msra.mxu0 0.0
        %427 = vmatpush.msra.mxu0 0.0
        %428 = vmatpush.msra.mxu0 0.0
        %429 = vmatpush.msra.mxu0 0.0
        %430 = vmatpush.msra.mxu0 0.0
        %431 = vmatpush.msra.mxu0 0.0
        %432 = vmatpush.msra.mxu0 0.0
        %433 = vmatpush.msra.mxu0 0.0
        %434 = vmatpush.msra.mxu0 0.0
        %435 = vmatpush.msra.mxu0 0.0
        %436 = vmatpush.msra.mxu0 0.0
        %437 = vmatpush.msra.mxu0 0.0
        %438 = vmatpush.msra.mxu0 0.0
        %439 = vmatpush.msra.mxu0 0.0
        %440 = vmatpush.msra.mxu0 %v393
        %441 = vmatmul.f32.gmra.mxu0 %v403
        %v442 = vpop.f32.mrf.mxu0
        %v443 = vadd.f32 %v399, %v442
        %444 = vdwg.mxu0
        %v445 = vadd.f32 %v423, 1.0
        %v446 = vadd.f32 %v443, 1.0
        %v449 = vrot.slane %v446, 4
        %v450 = vsel %vm343, %v445, %v449
        %v452 = vmul.f32 %v326, %v450
        %455 = vst.sshfl [vmem:[#allocation1] sm:$0xff pattern:$0x75316420] %v423
        %456 = vst.sshfl [vmem:[#allocation1 + $0x8] sm:$0xff pattern:$0x75316420] %v443
        %s457 = scalar_lea.vmem [#allocation1], 1
        %v458 = vld [vmem:[%s457] ss:$2 sm:$0xff]
        %v460 = vadd.f32 %v452, %v458
        %461 = vst [vmem:[%s313] sm:$0xff] %v460
        %s462 = sand.u32 %s185, 1
        %s463 = scalar_lea.sflag [#allocation4], %s462
        %s464 = sand.u32 %s185, 1
        %s465 = smul.addr %s464, 8
        %s466 = scalar_lea.vmem [#allocation5], %s465
        // Predicated region
        $region49: #{tpu_custom_call.1} parent=43 // pred_check
          %p467 = pneg %p195
        $region50: #{tpu_custom_call.1} parent=43 // pred_check_branch
          %469 = sbr.rel (%p467) target = $region52
        $region51: #{tpu_custom_call.1} parent=43 // pred_region
          %s470 = smul.u32 2, %s28
          %472 = vsyncadd %s463, 0
          %s473 = smul.addr %s27, 2
          %s474 = sadd.s32 %s470, %s473
          %s475 = smul.addr %s474, 4
          %s476 = scalar_lea.hbm %s6, %s475
          %s478 = sshll.u32 %s466, 4
          %s479 = int_to_ptr.vmem [resolvable:$true] %s478
          %s480 = sshll.u32 %s476, 4
          %s481 = int_to_ptr.hbm [resolvable:$true] %s480
          %483 = dma.vmem_to_hbm [thread:$0]  %s479, 128, %s481, %s463
        $region52: #{tpu_custom_call.1} parent=43 // pred_fallthru
          _
      $region44: #{tpu_custom_call.1} parent=5 // pred_fallthru
        _
      %p484 = scmp.le.s32.totalorder 2, %s18
      // Predicated region
      $region53: #{tpu_custom_call.1} parent=5 // pred_check
        %p485 = pneg %p484
      $region54: #{tpu_custom_call.1} parent=5 // pred_check_branch
        %487 = sbr.rel (%p485) target = $region56
      $region55: #{tpu_custom_call.1} parent=5 // pred_region
        %s488 = ssub.s32 %s18, 2
        // Predicated region
        $region57: #{tpu_custom_call.1} parent=55 // pred_check
          %p489 = pneg %p201
        $region58: #{tpu_custom_call.1} parent=55 // pred_check_branch
          %491 = sbr.rel (%p489) target = $region60
        $region59: #{tpu_custom_call.1} parent=55 // pred_region
          %s492 = sand.u32 %s186, 1
          %s493 = scalar_lea.sflag [#allocation4], %s492
          %s494 = sand.u32 %s186, 1
          %s495 = smul.addr %s494, 8
          %s496 = scalar_lea.vmem [#allocation5], %s495
          %498 = dma.done %s493, 128
        $region60: #{tpu_custom_call.1} parent=55 // pred_fallthru
          _
      $region56: #{tpu_custom_call.1} parent=5 // pred_fallthru
        _
    $region6: #{tpu_custom_call.1} parent=1 // loop_footer
      %s22 = sadd.s32 1, %s18
    $region7: #{tpu_custom_call.1} parent=1 // loop_footer_branch
      %17 = sbr.rel target = $region3
    $region8: #{tpu_custom_call.1} parent=1 // loop_exit
      _
    %499 = vsyncpa [#allocation3], 1
    %s500 = scalar_lea.sflag [#allocation3], 1
    %501 = vsyncpa %s500, 1
    %502 = vsyncpa [#allocation4], 1
    %s503 = scalar_lea.sflag [#allocation4], 1
    %504 = vsyncpa %s503, 1

</llo_original>
